<compile_context>
chip_gen: v6e
topology: v6e:2x2x1
jax: 0.10.0
libtpu: 0.0.40
codegen_flags: <defaults>
</compile_context>

<pallas_src>
from functools import partial

import jax
import jax.numpy as jnp
from jax.experimental import pallas as pl
from jax.experimental.pallas import tpu as pltpu


# ------------------------------------------------------------------ #
# Hardware-aware sizing                                                #
# ------------------------------------------------------------------ #
def _detect_vmem_bytes():
    try:
        info = pltpu.get_tpu_info()
        cap = getattr(info, "vmem_capacity_bytes", None)
        if cap:
            return int(cap)
    except Exception:
        pass
    return 64 * 1024 * 1024  # conservative: v7x per-TensorCore VMEM


_VMEM_BYTES = _detect_vmem_bytes()
_BIG_VMEM = _VMEM_BYTES >= (100 << 20)          # v5e / v6e (128 MiB)
_PROJ_ROW_TILE = 512 if _BIG_VMEM else 256       # projection M-tile cap
_ATTN_L_TILE = 256 if _BIG_VMEM else 128         # attention L-tile cap
_VMEM_LIMIT = int(min(max(_VMEM_BYTES - (16 << 20), 32 << 20), 100 << 20))


def _pick_row_tile(m, max_tile):
    """Row tile: full extent if small, else a multiple-of-8 divisor, else a
    ragged-tail tile (cdiv grid; Pallas masks out-of-bounds rows)."""
    max_tile = max(8, (max_tile // 8) * 8)
    if m <= max_tile:
        return m
    for t in range(max_tile, 7, -8):
        if m % t == 0:
            return t
    return max_tile  # ragged tail — never a single full-M block


# ------------------------------------------------------------------ #
# Projection kernels: acc = x @ w + b                                  #
# ------------------------------------------------------------------ #
def _proj_kernel_full(x_ref, w_ref, b_ref, *o_refs):
    # Full-width weight block; all column splits written each step.
    acc = (
        jnp.dot(x_ref[...], w_ref[...], preferred_element_type=jnp.float32)
        + b_ref[...]
    )
    off = 0
    for o_ref in o_refs:
        n = o_ref.shape[-1]
        o_ref[...] = acc[:, off:off + n].astype(o_ref.dtype)
        off += n


def _proj_kernel_col_tiled(x_ref, w_ref, b_ref, *o_refs):
    # Column-tiled: grid axis 1 selects the split; x / outputs stay resident
    # across that axis, only the (K, split) weight block streams.
    j = pl.program_id(1)
    acc = (
        jnp.dot(x_ref[...], w_ref[...], preferred_element_type=jnp.float32)
        + b_ref[...]
    )
    for idx, o_ref in enumerate(o_refs):
        def _write(o_ref=o_ref):
            o_ref[...] = acc.astype(o_ref.dtype)
        pl.when(j == idx)(_write)


def pallas_fused_linear(x, w, b, split_sizes, *, max_row_tile=_PROJ_ROW_TILE):
    """x: (M, K), w: (K, N) pre-transposed, b: (1, N).  Returns one (M, n_i)
    array per split (lane-dense outputs, no host-side slicing)."""
    M, K = x.shape
    N = w.shape[1]
    assert sum(split_sizes) == N
    tm = _pick_row_tile(M, max_row_tile)
    grid_rows = pl.cdiv(M, tm)
    out_shape = tuple(jax.ShapeDtypeStruct((M, n), x.dtype) for n in split_sizes)

    col_tiled = (
        len(split_sizes) > 1
        and len(set(split_sizes)) == 1
        and split_sizes[0] % 128 == 0
    )
    if col_tiled:
        ns = split_sizes[0]
        grid = (grid_rows, len(split_sizes))
        in_specs = [
            pl.BlockSpec((tm, K), lambda i, j: (i, 0)),
            pl.BlockSpec((K, ns), lambda i, j: (0, j)),
            pl.BlockSpec((1, ns), lambda i, j: (0, j)),
        ]
        out_specs = tuple(
            pl.BlockSpec((tm, ns), lambda i, j: (i, 0)) for _ in split_sizes
        )
        kernel = _proj_kernel_col_tiled
        dims = ("parallel", "arbitrary")  # outputs revisited along j
    else:
        grid = (grid_rows,)
        in_specs = [
            pl.BlockSpec((tm, K), lambda i: (i, 0)),
            pl.BlockSpec((K, N), lambda i: (0, 0)),
            pl.BlockSpec((1, N), lambda i: (0, 0)),
        ]
        out_specs = tuple(
            pl.BlockSpec((tm, n), lambda i: (i, 0)) for n in split_sizes
        )
        kernel = _proj_kernel_full
        dims = ("parallel",)

    return pl.pallas_call(
        kernel,
        out_shape=out_shape,
        grid=grid,
        in_specs=in_specs,
        out_specs=out_specs,
        compiler_params=pltpu.CompilerParams(
            dimension_semantics=dims, vmem_limit_bytes=_VMEM_LIMIT
        ),
    )(x, w, b)


# ------------------------------------------------------------------ #
# Attention core: grid = (batch, L_tiles); blocks have the batch dim    #
# squeezed.  q_ref: (tL, E), k_ref/v_ref: (S, E), o_ref: (tL, E),        #
# w_ref: (tL, S).  Scratch: ctx_acc (tL, E) f32, w_acc (tL, S) f32.      #
# ------------------------------------------------------------------ #
def _mha_core_kernel(q_ref, k_ref, v_ref, o_ref, w_ref, ctx_acc, w_acc, *,
                     num_heads):
    tL, E = q_ref.shape
    D = E // num_heads

    for h in range(num_heads):  # static, small; writes go to VMEM, not regs
        lo = h * D
        q_h = q_ref[:, lo:lo + D]   # (tL, D); 1/sqrt(D) folded into W_q
        k_h = k_ref[:, lo:lo + D]   # (S, D)
        v_h = v_ref[:, lo:lo + D]   # (S, D)

        # scores: contract over D without materializing a K transpose
        s = jax.lax.dot_general(
            q_h, k_h, (((1,), (1,)), ((), ())),
            preferred_element_type=jnp.float32)          # (tL, S)
        s = s - jnp.max(s, axis=-1, keepdims=True)
        e = jnp.exp(s)
        # Exact normalization: returned weights must sum to 1 per row.
        attn = e * (1.0 / jnp.sum(e, axis=-1, keepdims=True))

        if h == 0:
            w_acc[...] = attn
        else:
            w_acc[...] += attn

        ctx_acc[:, lo:lo + D] = jax.lax.dot_general(
            attn.astype(v_h.dtype), v_h, (((1,), (0,)), ((), ())),
            preferred_element_type=jnp.float32)

    o_ref[...] = ctx_acc[...].astype(o_ref.dtype)
    w_ref[...] = (w_acc[...] * (1.0 / num_heads)).astype(w_ref.dtype)


def mha_attention_core(q, k, v, num_heads):
    # q: (Nb, L, E), k/v: (Nb, S, E) -> (ctx (Nb, L, E), weights (Nb, L, S))
    Nb, L, E = q.shape
    S = k.shape[1]
    tL = _pick_row_tile(L, _ATTN_L_TILE)
    grid = (Nb, pl.cdiv(L, tL))

    kernel = partial(_mha_core_kernel, num_heads=num_heads)
    return pl.pallas_call(
        kernel,
        out_shape=(
            jax.ShapeDtypeStruct((Nb, L, E), q.dtype),
            jax.ShapeDtypeStruct((Nb, L, S), q.dtype),   # compute dtype (torch)
        ),
        grid=grid,
        in_specs=[
            pl.BlockSpec((None, tL, E), lambda n, i: (n, i, 0)),
            pl.BlockSpec((None, S, E), lambda n, i: (n, 0, 0)),
            pl.BlockSpec((None, S, E), lambda n, i: (n, 0, 0)),
        ],
        out_specs=(
            pl.BlockSpec((None, tL, E), lambda n, i: (n, i, 0)),
            pl.BlockSpec((None, tL, S), lambda n, i: (n, i, 0)),
        ),
        scratch_shapes=[
            pltpu.VMEM((tL, E), jnp.float32),
            pltpu.VMEM((tL, S), jnp.float32),
        ],
        compiler_params=pltpu.CompilerParams(
            dimension_semantics=("parallel", "parallel"),
            vmem_limit_bytes=_VMEM_LIMIT,
        ),
    )(q, k, v)


# ------------------------------------------------------------------ #
# One-time parameter preparation (pre-transpose weights, fold scale)    #
# ------------------------------------------------------------------ #
def prepare_mha_params(params, num_heads):
    in_w = jnp.asarray(params["in_proj_weight"])    # (3E, E)
    in_b = jnp.asarray(params["in_proj_bias"])      # (3E,)
    out_w = jnp.asarray(params["out_proj_weight"])  # (E, E)
    out_b = jnp.asarray(params["out_proj_bias"])    # (E,)
    three_e, E = in_w.shape
    assert three_e == 3 * E and E % num_heads == 0
    D = E // num_heads
    scale = 1.0 / float(D) ** 0.5

    # Fold 1/sqrt(D) into the Q projection rows (once, at load time).
    row_scale = jnp.concatenate(
        [jnp.full((E,), scale, in_w.dtype), jnp.ones((2 * E,), in_w.dtype)])
    in_w_s = in_w * row_scale[:, None]
    in_b_s = in_b * row_scale

    w_qkv = jnp.asarray(in_w_s.T)                   # (E, 3E): x @ w_qkv
    b_qkv = jnp.asarray(in_b_s.reshape(1, 3 * E))
    return {
        "num_heads": num_heads,
        "embed_dim": E,
        "w_qkv": w_qkv, "b_qkv": b_qkv,
        "w_q": w_qkv[:, :E], "b_q": b_qkv[:, :E],
        "w_k": w_qkv[:, E:2 * E], "b_k": b_qkv[:, E:2 * E],
        "w_v": w_qkv[:, 2 * E:], "b_v": b_qkv[:, 2 * E:],
        "w_kv": w_qkv[:, E:], "b_kv": b_qkv[:, E:],
        "w_out": jnp.asarray(out_w.T), "b_out": jnp.asarray(out_b.reshape(1, E)),
    }


# ------------------------------------------------------------------ #
# Full TorchMhaWrapper forward (need_weights=True, average weights)     #
# ------------------------------------------------------------------ #
def torch_mha_wrapper_forward(query, key, value, prepared, *, need_weights=True):
    num_heads = prepared["num_heads"]
    E = prepared["embed_dim"]
    L, Nb, _ = query.shape
    S = key.shape[0]

    self_attn = (query is key) and (key is value)
    kv_same = key is value

    # One activation relayout to batch-major (kept out of the kernels so the
    # attention core sees dense (L, E) / (S, E) per-batch blocks).
    q_in = jnp.transpose(query, (1, 0, 2)).reshape(Nb * L, E)

    if self_attn:
        q2, k2, v2 = pallas_fused_linear(
            q_in, prepared["w_qkv"], prepared["b_qkv"], (E, E, E))
    else:
        k_in = jnp.transpose(key, (1, 0, 2)).reshape(Nb * S, E)
        (q2,) = pallas_fused_linear(q_in, prepared["w_q"], prepared["b_q"], (E,))
        if kv_same:
            k2, v2 = pallas_fused_linear(
                k_in, prepared["w_kv"], prepared["b_kv"], (E, E))
        else:
            v_in = jnp.transpose(value, (1, 0, 2)).reshape(Nb * S, E)
            (k2,) = pallas_fused_linear(k_in, prepared["w_k"], prepared["b_k"], (E,))
            (v2,) = pallas_fused_linear(v_in, prepared["w_v"], prepared["b_v"], (E,))

    q3 = q2.reshape(Nb, L, E)     # free reshapes (row order already batch-major)
    k3 = k2.reshape(Nb, S, E)
    v3 = v2.reshape(Nb, S, E)

    ctx, attn_weights = mha_attention_core(q3, k3, v3, num_heads)

    (out2,) = pallas_fused_linear(
        ctx.reshape(Nb * L, E), prepared["w_out"], prepared["b_out"], (E,))
    out = jnp.transpose(out2.reshape(Nb, L, E), (1, 0, 2))  # back to (L, Nb, E)

    # Wrapper semantics: filter None outputs.
    if need_weights:
        return out, attn_weights
    return (out,)


# ------------------------------------------------------------------ #
# Pure-JAX reference for correctness checking                          #
# ------------------------------------------------------------------ #
def mha_reference(query, key, value, params, num_heads):
    L, Nb, E = query.shape
    S = key.shape[0]
    D = E // num_heads
    in_w, in_b = params["in_proj_weight"], params["in_proj_bias"]
    out_w, out_b = params["out_proj_weight"], params["out_proj_bias"]

    q = query @ in_w[:E].T + in_b[:E]
    k = key @ in_w[E:2 * E].T + in_b[E:2 * E]
    v = value @ in_w[2 * E:].T + in_b[2 * E:]

    q = q.reshape(L, Nb * num_heads, D).transpose(1, 0, 2)
    k = k.reshape(S, Nb * num_heads, D).transpose(1, 0, 2)
    v = v.reshape(S, Nb * num_heads, D).transpose(1, 0, 2)

    scores = (q / jnp.sqrt(D)) @ k.transpose(0, 2, 1)
    attn = jax.nn.softmax(scores, axis=-1)
    ctx = attn @ v
    ctx = ctx.transpose(1, 0, 2).reshape(L, Nb, E)
    out = ctx @ out_w.T + out_b
    w_avg = attn.reshape(Nb, num_heads, L, S).mean(axis=1)
    return out, w_avg


if __name__ == "__main__":
    # Small shapes: seq L=8, batch N=2, embed E=32, heads H=4 (head_dim=8).
    L, Nb, E, H = 8, 2, 32, 4
    S_CROSS = 16

    key0 = jax.random.PRNGKey(0)
    kx, kk, kv, k1, k2, k3, k4 = jax.random.split(key0, 7)

    x = jax.random.normal(kx, (L, Nb, E), dtype=jnp.float32)
    key_t = jax.random.normal(kk, (S_CROSS, Nb, E), dtype=jnp.float32)
    value_t = jax.random.normal(kv, (S_CROSS, Nb, E), dtype=jnp.float32)

    params = {
        "in_proj_weight": jax.random.normal(k1, (3 * E, E), jnp.float32) * 0.1,
        "in_proj_bias": jax.random.normal(k2, (3 * E,), jnp.float32) * 0.1,
        "out_proj_weight": jax.random.normal(k3, (E, E), jnp.float32) * 0.1,
        "out_proj_bias": jax.random.normal(k4, (E,), jnp.float32) * 0.1,
    }
    prepared = prepare_mha_params(params, H)   # once, at parameter load

    # --- Self-attention (fused QKV projection path) --------------------
    out, weights = torch_mha_wrapper_forward(x, x, x, prepared)
    out = jax.block_until_ready(out)
    weights = jax.block_until_ready(weights)
    ref_out, ref_w = mha_reference(x, x, x, params, H)
    assert out.shape == (L, Nb, E)
    assert weights.shape == (Nb, L, L)
    assert jnp.allclose(out, ref_out, rtol=2e-3, atol=2e-3)
    assert jnp.allclose(weights, ref_w, rtol=2e-3, atol=2e-3)
    # Exact-softmax check: returned averaged weights sum to 1 per row.
    assert jnp.allclose(jnp.sum(weights, axis=-1), 1.0, atol=1e-5)

    # --- Cross-attention (separate projection path) ---------------------
    out2, weights2 = torch_mha_wrapper_forward(x, key_t, value_t, prepared)
    out2 = jax.block_until_ready(out2)
    weights2 = jax.block_until_ready(weights2)
    ref_out2, ref_w2 = mha_reference(x, key_t, value_t, params, H)
    assert out2.shape == (L, Nb, E)
    assert weights2.shape == (Nb, L, S_CROSS)
    assert jnp.allclose(out2, ref_out2, rtol=2e-3, atol=2e-3)
    assert jnp.allclose(weights2, ref_w2, rtol=2e-3, atol=2e-3)
    assert jnp.allclose(jnp.sum(weights2, axis=-1), 1.0, atol=1e-5)

    # --- need_weights=False path (wrapper filters the None entry) -------
    outs = torch_mha_wrapper_forward(x, x, x, prepared, need_weights=False)
    assert len(outs) == 1
    out3 = jax.block_until_ready(outs[0])
    assert jnp.allclose(out3, ref_out, rtol=2e-3, atol=2e-3)

    print("KERNEL_OK")
</pallas_src>

<mosaic_0001>
module attributes {stable_mosaic.version = 11 : i64} {
  func.func @_proj_kernel_full(%arg0: i32, %arg1: memref<16x32xf32, #tpu.memory_space<vmem>>, %arg2: memref<32x96xf32, #tpu.memory_space<vmem>>, %arg3: memref<1x96xf32, #tpu.memory_space<vmem>>, %arg4: memref<16x32xf32, #tpu.memory_space<vmem>>, %arg5: memref<16x32xf32, #tpu.memory_space<vmem>>, %arg6: memref<16x32xf32, #tpu.memory_space<vmem>>) attributes {dimension_semantics = [#tpu.dimension_semantics<parallel>], iteration_bounds = array<i64: 1>, scalar_prefetch = 0 : i64, scratch_operands = 0 : i64, tpu.core_type = #tpu.core_type<tc>, window_params = [{transform_indices = @transform_0, window_bounds = array<i64: 16, 32>}, {pipeline_mode = #tpu.pipeline_mode<synchronous>, transform_indices = @transform_1, window_bounds = array<i64: 32, 96>}, {pipeline_mode = #tpu.pipeline_mode<synchronous>, transform_indices = @transform_2, window_bounds = array<i64: 1, 96>}, {transform_indices = @transform_3, window_bounds = array<i64: 16, 32>}, {transform_indices = @transform_4, window_bounds = array<i64: 16, 32>}, {transform_indices = @transform_5, window_bounds = array<i64: 16, 32>}]} {
    %c0 = arith.constant 0 : index
    %c0_0 = arith.constant 0 : index
    %0 = vector.load %arg1[%c0, %c0_0] : memref<16x32xf32, #tpu.memory_space<vmem>>, vector<16x32xf32>
    %c0_1 = arith.constant 0 : index
    %c0_2 = arith.constant 0 : index
    %1 = vector.load %arg2[%c0_1, %c0_2] : memref<32x96xf32, #tpu.memory_space<vmem>>, vector<32x96xf32>
    %cst = arith.constant dense<0.000000e+00> : vector<16x96xf32>
    %2 = tpu.matmul %0, %1, %cst {dimension_numbers = #tpu.dot_dimension_numbers<[1], [0], [0], [1], [0, 0, 1, 1], [], []>} : vector<16x32xf32>, vector<32x96xf32>, vector<16x96xf32> -> vector<16x96xf32>
    %c0_3 = arith.constant 0 : index
    %c0_4 = arith.constant 0 : index
    %3 = vector.load %arg3[%c0_3, %c0_4] : memref<1x96xf32, #tpu.memory_space<vmem>>, vector<1x96xf32>
    %4 = vector.broadcast %3 : vector<1x96xf32> to vector<16x96xf32>
    %5 = arith.addf %2, %4 : vector<16x96xf32>
    %6 = vector.extract_strided_slice %5 {offsets = [0, 0], sizes = [16, 32], strides = [1, 1]} : vector<16x96xf32> to vector<16x32xf32>
    %c0_5 = arith.constant 0 : index
    %c0_6 = arith.constant 0 : index
    %7 = vector.load %arg4[%c0_5, %c0_6] : memref<16x32xf32, #tpu.memory_space<vmem>>, vector<16x32xf32>
    tpu.vector_store %arg4[%c0_5, %c0_6], %6 {strides = array<i32>} : memref<16x32xf32, #tpu.memory_space<vmem>>, vector<16x32xf32>,
    %8 = vector.extract_strided_slice %5 {offsets = [0, 32], sizes = [16, 32], strides = [1, 1]} : vector<16x96xf32> to vector<16x32xf32>
    %c0_7 = arith.constant 0 : index
    %c0_8 = arith.constant 0 : index
    %9 = vector.load %arg5[%c0_7, %c0_8] : memref<16x32xf32, #tpu.memory_space<vmem>>, vector<16x32xf32>
    tpu.vector_store %arg5[%c0_7, %c0_8], %8 {strides = array<i32>} : memref<16x32xf32, #tpu.memory_space<vmem>>, vector<16x32xf32>,
    %10 = vector.extract_strided_slice %5 {offsets = [0, 64], sizes = [16, 32], strides = [1, 1]} : vector<16x96xf32> to vector<16x32xf32>
    %c0_9 = arith.constant 0 : index
    %c0_10 = arith.constant 0 : index
    %11 = vector.load %arg6[%c0_9, %c0_10] : memref<16x32xf32, #tpu.memory_space<vmem>>, vector<16x32xf32>
    tpu.vector_store %arg6[%c0_9, %c0_10], %10 {strides = array<i32>} : memref<16x32xf32, #tpu.memory_space<vmem>>, vector<16x32xf32>,
    return
  }
  func.func @transform_0(%arg0: i32) -> (i32, i32) {
    %c0_i32 = arith.constant 0 : i32
    %c0_i32_0 = arith.constant 0 : i32
    return %arg0, %c0_i32 : i32, i32
  }
  func.func @transform_1(%arg0: i32) -> (i32, i32) {
    %c0_i32 = arith.constant 0 : i32
    %c0_i32_0 = arith.constant 0 : i32
    %c0_i32_1 = arith.constant 0 : i32
    return %c0_i32, %c0_i32_0 : i32, i32
  }
  func.func @transform_2(%arg0: i32) -> (i32, i32) {
    %c0_i32 = arith.constant 0 : i32
    %c0_i32_0 = arith.constant 0 : i32
    %c0_i32_1 = arith.constant 0 : i32
    return %c0_i32, %c0_i32_0 : i32, i32
  }
  func.func @transform_3(%arg0: i32) -> (i32, i32) {
    %c0_i32 = arith.constant 0 : i32
    %c0_i32_0 = arith.constant 0 : i32
    return %arg0, %c0_i32 : i32, i32
  }
  func.func @transform_4(%arg0: i32) -> (i32, i32) {
    %c0_i32 = arith.constant 0 : i32
    %c0_i32_0 = arith.constant 0 : i32
    return %arg0, %c0_i32 : i32, i32
  }
  func.func @transform_5(%arg0: i32) -> (i32, i32) {
    %c0_i32 = arith.constant 0 : i32
    %c0_i32_0 = arith.constant 0 : i32
    return %arg0, %c0_i32 : i32, i32
  }
}

</mosaic_0001>

<llo_original>
// kernel: tpu_custom_call.1
$region0: #{tpu_custom_call.1}
  #allocation0 [shape = 'u32[]', space=smem, size = 0x4, offset = 0x4, fixed_abs, tag = 'smem constant byte address 0x4 - core index']
  #allocation1 [shape = 'u32[144,128]{1,0:T(1,128)}', space=vmem, size = 0x12000, scoped, tag = 'internal scratch']
  %s0 = inlined_call_operand.hbm [shape: f32[16,32], index: 0, kind: input, shape index: {}]
  %s1 = inlined_call_operand.hbm [shape: f32[32,96], index: 1, kind: input, shape index: {}]
  %s2 = inlined_call_operand.vmem [shape: f32[1,96], index: 2, kind: input, shape index: {}]
  %s3 = inlined_call_operand.hbm [shape: f32[16,32], index: 3, kind: output, shape index: {0}]
  %s4 = inlined_call_operand.hbm [shape: f32[16,32], index: 4, kind: output, shape index: {1}]
  %s5 = inlined_call_operand.hbm [shape: f32[16,32], index: 5, kind: output, shape index: {2}]
  %6 = xla_tuple %s3, %s4, %s5
  %s7 = sld [smem:[#allocation0]]
  $region46: #{tpu_custom_call.1} parent=0
    _
  %s9 = ssub.s32 1, %s7
  %s10 = scalar_select 0, %s9, %s7
  $region1: #{tpu_custom_call.1} parent=0
    #allocation2 [shape = 'u8[8192]{0}', space=vmem, size = 0x2000, scoped, tag = 'input window, operand 0, single buffered']
    #allocation3 [shape = 's32[1]{0}', space=sflag, size = 0x4, scoped, tag = 'scoped memory for tpu_custom_call.1']
    #allocation4 [shape = 's32[1]{0}', space=sflag, size = 0x4, scoped, tag = 'scoped memory for tpu_custom_call.1']
    #allocation5 [shape = 'u8[16384]{0}', space=vmem, size = 0x4000, scoped, tag = 'input window, operand 1, single buffered']
    #allocation6 [shape = 's32[1]{0}', space=sflag, size = 0x4, scoped, tag = 'scoped memory for tpu_custom_call.1']
    #allocation7 [shape = 'u8[8192]{0}', space=vmem, size = 0x2000, scoped, tag = 'output window, operand 0, single buffered']
    #allocation8 [shape = 'u8[8192]{0}', space=vmem, size = 0x2000, scoped, tag = 'output window, operand 1, single buffered']
    #allocation9 [shape = 's32[1]{0}', space=sflag, size = 0x4, scoped, tag = 'scoped memory for tpu_custom_call.1']
    #allocation10 [shape = 'u8[8192]{0}', space=vmem, size = 0x2000, scoped, tag = 'output window, operand 2, single buffered']
    %11 = vsyncpa [#allocation3], 0
    %12 = vsyncpa [#allocation6], 0
    %13 = vsyncpa [#allocation4], 0
    %14 = vsyncpa [#allocation9], 0
    // Predicated region
    $region2: #{tpu_custom_call.1} parent=1 // pred_check
      _
    $region3: #{tpu_custom_call.1} parent=1 // pred_check_branch
      %16 = sbr.rel (0) target = $region5
    $region4: #{tpu_custom_call.1} parent=1 // pred_region
      %s18 = ssub.s32 256, 256
      %19 = vsyncadd [#allocation3], %s18
      %s20 = sshll.u32 [#allocation2], 4
      %s21 = int_to_ptr.vmem [resolvable:$true] %s20
      %26 = dma.hbm_to_vmem [thread:$0]  %s0, 256, %s21, [#allocation3], 128, 128, 8
    $region5: #{tpu_custom_call.1} parent=1 // pred_fallthru
      _
    // Predicated region
    $region6: #{tpu_custom_call.1} parent=1 // pred_check
      _
    $region7: #{tpu_custom_call.1} parent=1 // pred_check_branch
      %28 = sbr.rel (0) target = $region9
    $region8: #{tpu_custom_call.1} parent=1 // pred_region
      %s30 = ssub.s32 512, 512
      %31 = vsyncadd [#allocation6], %s30
      %s32 = sshll.u32 [#allocation5], 4
      %s33 = int_to_ptr.vmem [resolvable:$true] %s32
      %38 = dma.hbm_to_vmem [thread:$0]  %s1, 512, %s33, [#allocation6], 128, 128, 8
    $region9: #{tpu_custom_call.1} parent=1 // pred_fallthru
      _
    // Predicated region
    $region10: #{tpu_custom_call.1} parent=1 // pred_check
      _
    $region11: #{tpu_custom_call.1} parent=1 // pred_check_branch
      %40 = sbr.rel (0) target = $region13
    $region12: #{tpu_custom_call.1} parent=1 // pred_region
      _
    $region13: #{tpu_custom_call.1} parent=1 // pred_fallthru
      _
    // Predicated region
    $region14: #{tpu_custom_call.1} parent=1 // pred_check
      _
    $region15: #{tpu_custom_call.1} parent=1 // pred_check_branch
      %42 = sbr.rel (0) target = $region17
    $region16: #{tpu_custom_call.1} parent=1 // pred_region
      %43 = dma.done [#allocation3], 256
    $region17: #{tpu_custom_call.1} parent=1 // pred_fallthru
      _
    // Predicated region
    $region18: #{tpu_custom_call.1} parent=1 // pred_check
      _
    $region19: #{tpu_custom_call.1} parent=1 // pred_check_branch
      %45 = sbr.rel (0) target = $region21
    $region20: #{tpu_custom_call.1} parent=1 // pred_region
      %46 = dma.done [#allocation6], 512
    $region21: #{tpu_custom_call.1} parent=1 // pred_fallthru
      _
    %v47 = vld [vmem:[#allocation2] sm:$0xff]
    %v48 = vld [vmem:[#allocation2 + $0x8] sm:$0xff]
    %v49 = vld [vmem:[#allocation5] sm:$0xff]
    %v50 = vld [vmem:[#allocation5 + $0x8] sm:$0xff]
    %v51 = vld [vmem:[#allocation5 + $0x10] sm:$0xff]
    %v52 = vld [vmem:[#allocation5 + $0x18] sm:$0xff]
    %v53 = vld [vmem:[%s2] sm:$0x1]
    %v55 = vlaneseq
    %v56 = vshrl.u32 %v55, 7
    %v57 = vsub.s32 0, %v56
    %v58 = vrot.slane %v53, %v57
    %vm60 = vcmask 261120
    %v62 = vsel %vm60, %v47, 0
    %v65 = vsel %vm60, %v48, 0
    %67 = vmatprep.subr.mxu0 0.0
    %68 = vmatpush1.msra.mxu0 0.0
    %69 = vmatprep.subr.mxu0 0.0
    %70 = vmatpush1.msra.mxu0 0.0
    %71 = vmatprep.subr.mxu0 0.0
    %72 = vmatpush1.msra.mxu0 0.0
    %73 = vmatprep.subr.mxu0 0.0
    %74 = vmatpush1.msra.mxu0 0.0
    %75 = vmatprep.subr.mxu0 0.0
    %76 = vmatpush1.msra.mxu0 0.0
    %77 = vmatprep.subr.mxu0 0.0
    %78 = vmatpush1.msra.mxu0 0.0
    %79 = vmatprep.subr.mxu0 0.0
    %80 = vmatpush1.msra.mxu0 0.0
    %81 = vmatprep.subr.mxu0 0.0
    %82 = vmatpush1.msra.mxu0 0.0
    %83 = vmatprep.subr.mxu0 0.0
    %84 = vmatpush1.msra.mxu0 0.0
    %85 = vmatprep.subr.mxu0 0.0
    %86 = vmatpush1.msra.mxu0 0.0
    %87 = vmatprep.subr.mxu0 0.0
    %88 = vmatpush1.msra.mxu0 0.0
    %89 = vmatprep.subr.mxu0 0.0
    %90 = vmatpush1.msra.mxu0 0.0
    %91 = vmatprep.subr.mxu0 0.0
    %92 = vmatpush1.msra.mxu0 %v52
    %93 = vmatprep.subr.mxu0 0.0
    %94 = vmatpush1.msra.mxu0 %v51
    %95 = vmatprep.subr.mxu0 0.0
    %96 = vmatpush1.msra.mxu0 %v50
    %97 = vmatprep.subr.mxu0 0.0
    %98 = vmatpush1.msra.mxu0 %v49
    %99 = vmatprep.subr.mxu0 0.0
    %100 = vmatpush2.msra.mxu0 0.0
    %101 = vmatprep.subr.mxu0 0.0
    %102 = vmatpush2.msra.mxu0 0.0
    %103 = vmatprep.subr.mxu0 0.0
    %104 = vmatpush2.msra.mxu0 0.0
    %105 = vmatprep.subr.mxu0 0.0
    %106 = vmatpush2.msra.mxu0 0.0
    %107 = vmatprep.subr.mxu0 0.0
    %108 = vmatpush2.msra.mxu0 0.0
    %109 = vmatprep.subr.mxu0 0.0
    %110 = vmatpush2.msra.mxu0 0.0
    %111 = vmatprep.subr.mxu0 0.0
    %112 = vmatpush2.msra.mxu0 0.0
    %113 = vmatprep.subr.mxu0 0.0
    %114 = vmatpush2.msra.mxu0 0.0
    %115 = vmatprep.subr.mxu0 0.0
    %116 = vmatpush2.msra.mxu0 0.0
    %117 = vmatprep.subr.mxu0 0.0
    %118 = vmatpush2.msra.mxu0 0.0
    %119 = vmatprep.subr.mxu0 0.0
    %120 = vmatpush2.msra.mxu0 0.0
    %121 = vmatprep.subr.mxu0 0.0
    %122 = vmatpush2.msra.mxu0 0.0
    %123 = vmatprep.subr.mxu0 0.0
    %124 = vmatpush2.msra.mxu0 0.0
    %125 = vmatprep.subr.mxu0 0.0
    %126 = vmatpush2.msra.mxu0 0.0
    %127 = vmatprep.subr.mxu0 0.0
    %128 = vmatpush2.msra.mxu0 0.0
    %129 = vmatprep.subr.mxu0 0.0
    %130 = vmatpush2.msra.mxu0 0.0
    %131 = vmatprep.mubr.f32.mxu0 0.0
    %132 = vmatmul.mubr.f32.gmra.mxu0 %v62
    %v133 = vpop.f32.mrf.mxu0
    %v134 = vadd.f32 %v58, %v133
    %v135 = vpop.f32.mrf.mxu0
    %136 = vmatprep.mubr.f32.mxu0 0.0
    %137 = vmatmul.mubr.f32.gmra.mxu0 %v65
    %v138 = vpop.f32.mrf.mxu0
    %v139 = vadd.f32 %v58, %v138
    %v140 = vpop.f32.mrf.mxu0
    %141 = vdwg.mxu0
    %142 = vst.msk [vmem:[#allocation7] sm:$0xff] %vm60, %v134
    %143 = vst.msk [vmem:[#allocation7 + $0x8] sm:$0xff] %vm60, %v139
    %146 = vrot.lane.b32.xlu0 %v134, 96
    %v147 = vpop.permute.xlu0 %146
    %148 = vrot.lane.b32.xlu0 %v139, 96
    %v149 = vpop.permute.xlu0 %148
    %152 = vst.msk [vmem:[#allocation8] sm:$0xff] %vm60, %v147
    %153 = vst.msk [vmem:[#allocation8 + $0x8] sm:$0xff] %vm60, %v149
    %154 = vrot.lane.b32.xlu0 %v134, 64
    %v155 = vpop.permute.xlu0 %154
    %156 = vrot.lane.b32.xlu0 %v139, 64
    %v157 = vpop.permute.xlu0 %156
    %160 = vst.msk [vmem:[#allocation10] sm:$0xff] %vm60, %v155
    %161 = vst.msk [vmem:[#allocation10 + $0x8] sm:$0xff] %vm60, %v157
    // Predicated region
    $region22: #{tpu_custom_call.1} parent=1 // pred_check
      _
    $region23: #{tpu_custom_call.1} parent=1 // pred_check_branch
      %163 = sbr.rel (0) target = $region25
    $region24: #{tpu_custom_call.1} parent=1 // pred_region
      %s165 = ssub.s32 256, 256
      %166 = vsyncadd [#allocation4], %s165
      %s167 = sshll.u32 [#allocation7], 4
      %s168 = int_to_ptr.vmem [resolvable:$true] %s167
      %173 = dma.vmem_to_hbm [thread:$0]  %s168, 256, %s3, [#allocation4], 128, 128, 8
    $region25: #{tpu_custom_call.1} parent=1 // pred_fallthru
      _
    // Predicated region
    $region26: #{tpu_custom_call.1} parent=1 // pred_check
      _
    $region27: #{tpu_custom_call.1} parent=1 // pred_check_branch
      %175 = sbr.rel (0) target = $region29
    $region28: #{tpu_custom_call.1} parent=1 // pred_region
      %s177 = ssub.s32 256, 256
      %178 = vsyncadd [#allocation9], %s177
      %s179 = sshll.u32 [#allocation8], 4
      %s180 = int_to_ptr.vmem [resolvable:$true] %s179
      %185 = dma.vmem_to_hbm [thread:$0]  %s180, 256, %s4, [#allocation9], 128, 128, 8
    $region29: #{tpu_custom_call.1} parent=1 // pred_fallthru
      _
    // Predicated region
    $region30: #{tpu_custom_call.1} parent=1 // pred_check
      _
    $region31: #{tpu_custom_call.1} parent=1 // pred_check_branch
      %187 = sbr.rel (0) target = $region33
    $region32: #{tpu_custom_call.1} parent=1 // pred_region
      %s189 = ssub.s32 256, 256
      %190 = vsyncadd [#allocation9], %s189
      %s191 = sshll.u32 [#allocation10], 4
      %s192 = int_to_ptr.vmem [resolvable:$true] %s191
      %197 = dma.vmem_to_hbm [thread:$0]  %s192, 256, %s5, [#allocation9], 128, 128, 8
    $region33: #{tpu_custom_call.1} parent=1 // pred_fallthru
      _
    // Predicated region
    $region34: #{tpu_custom_call.1} parent=1 // pred_check
      _
    $region35: #{tpu_custom_call.1} parent=1 // pred_check_branch
      %199 = sbr.rel (0) target = $region37
    $region36: #{tpu_custom_call.1} parent=1 // pred_region
      %200 = dma.done [#allocation4], 256
    $region37: #{tpu_custom_call.1} parent=1 // pred_fallthru
      _
    // Predicated region
    $region38: #{tpu_custom_call.1} parent=1 // pred_check
      _
    $region39: #{tpu_custom_call.1} parent=1 // pred_check_branch
      %202 = sbr.rel (0) target = $region41
    $region40: #{tpu_custom_call.1} parent=1 // pred_region
      %203 = dma.done [#allocation9], 256
    $region41: #{tpu_custom_call.1} parent=1 // pred_fallthru
      _
    // Predicated region
    $region42: #{tpu_custom_call.1} parent=1 // pred_check
      _
    $region43: #{tpu_custom_call.1} parent=1 // pred_check_branch
      %205 = sbr.rel (0) target = $region45
    $region44: #{tpu_custom_call.1} parent=1 // pred_region
      %206 = dma.done [#allocation9], 256
    $region45: #{tpu_custom_call.1} parent=1 // pred_fallthru
      _
    %207 = vsyncpa [#allocation3], 1
    %208 = vsyncpa [#allocation6], 1
    %209 = vsyncpa [#allocation4], 1
    %210 = vsyncpa [#allocation9], 1

</llo_original>
